<compile_context>
chip_gen: v5e
topology: v5e:2x2
jax: 0.10.0
libtpu: 0.0.40
codegen_flags: <defaults>
</compile_context>

<pallas_src>
import functools

import jax
import jax.numpy as jnp
from jax.experimental import pallas as pl
from jax.experimental.pallas import tpu as pltpu

_LANES = 128
_SUBLANES = 8


def _round_up(n, m):
    return (n + m - 1) // m * m


def _cdiv(a, b):
    return -(-a // b)


def _adaptive_kernel_layer_kernel(
    x_ref,      # (tm, D)   input rows (compute dtype; MXU operand)
    wdist_ref,  # (D, K)    -2 * kernels^T           (compute dtype)
    ksq_ref,    # (1, K)    ||k||^2                  (f32)
    wmix_ref,   # (D, K)    mixer weight, pre-transposed (compute dtype)
    bmix_ref,   # (1, K)    mixer bias               (f32)
    wout_ref,   # (K, O)    output_proj weight, pre-transposed (compute dtype)
    bout_ref,   # (1, O)    output_proj bias         (f32)
    o_ref,      # (tm, O)   output rows
):
    x = x_ref[...]                                    # keep dtype for the MXU

    # --- squared distance: ||x||^2 - 2 x.k + ||k||^2, clamped at 0 ---
    cross = jnp.dot(x, wdist_ref[...], preferred_element_type=jnp.float32)   # (tm, K)
    x_f32 = x.astype(jnp.float32)                     # no-op on the f32 path
    x_sq = jnp.sum(x_f32 * x_f32, axis=-1, keepdims=True)                    # (tm, 1)
    dist = jnp.maximum(x_sq + cross + ksq_ref[...], 0.0)                     # (tm, K)

    # --- mixer logits (separate MXU push: result starts at lane 0, so no
    #     lane-offset slice / XLU relayout of a fused block per grid step) ---
    logits = jnp.dot(x, wmix_ref[...], preferred_element_type=jnp.float32)
    logits = logits + bmix_ref[...]                                          # (tm, K)

    # softmax(logits) * exp(-dist): exponents fused, divide -> EUP reciprocal.
    m = jnp.max(logits, axis=-1, keepdims=True)                              # (tm, 1)
    denom = jnp.sum(jnp.exp(logits - m), axis=-1, keepdims=True)             # (tm, 1)
    inv_denom = pl.reciprocal(denom, approx=True)
    weighted = jnp.exp(logits - m - dist) * inv_denom                        # (tm, K) f32

    out = jnp.dot(weighted.astype(wout_ref.dtype), wout_ref[...],
                  preferred_element_type=jnp.float32) + bout_ref[...]
    o_ref[...] = out.astype(o_ref.dtype)


def _vmem_limit_bytes():
    """~3/4 of physical VMEM, capped at 96 MiB.

    v5e/v6e (128 MiB) -> 96 MiB; v7x (64 MiB per TC) -> 48 MiB.
    Falls back to the most conservative (v7x) figure if the query fails.
    """
    try:
        cap = int(pltpu.get_tpu_info().vmem_capacity_bytes)
    except Exception:
        cap = 64 * 1024 * 1024
    return min(96 * 1024 * 1024, (cap * 3) // 4)


def _choose_tm(D, K, O, itemsize, vmem_limit):
    """Largest row tile fitting the VMEM budget (lane/sublane-padded accounting)."""
    D_l, K_l, O_l = (_round_up(d, _LANES) for d in (D, K, O))
    D_s, K_s = _round_up(D, _SUBLANES), _round_up(K, _SUBLANES)
    # Resident weights / biases; assume double-buffered (worst case — the
    # Buffered(1) request below may halve this, budget conservatively).
    fixed = 2 * (2 * D_s * K_l * itemsize          # wdist + wmix
                 + K_s * O_l * itemsize            # wout
                 + _SUBLANES * (2 * K_l + O_l) * 4)  # f32 biases (padded rows)
    # Per-row cost: x double-buffer + f32 copy of x for ||x||^2 (narrow dtypes)
    # + f32 elementwise temporaries (cross/logits/dist/exp/weighted) + out d-buf.
    per_row = (2 * D_l * itemsize
               + (D_l * 4 if itemsize < 4 else 0)
               + 6 * K_l * 4
               + 2 * O_l * itemsize)
    budget = int(vmem_limit * 0.85) - fixed
    tm = max(_SUBLANES, (budget // per_row) // _SUBLANES * _SUBLANES)
    # ~0.35 us per grid step is fully amortized by a few thousand rows; larger
    # tiles only add first-result latency and padding waste.
    return min(tm, 4096)


def adaptive_kernel_layer(x, kernels, w_mix, b_mix, w_out, b_out, *,
                          tm=None, compute_dtype=None):
    """x: (B, S, D) -> (B, S, O). Params follow torch.nn.Linear layout.

    compute_dtype: optional fast path (e.g. jnp.bfloat16) for the x reads and
    MXU operands on this HBM-bound workload; distance/softmax math stays f32.
    Default keeps the caller's dtype (no silent precision change).
    """
    B, S, D = x.shape
    K = kernels.shape[0]
    O = w_out.shape[0]
    M = B * S

    cdt = jnp.dtype(x.dtype) if compute_dtype is None else jnp.dtype(compute_dtype)
    itemsize = cdt.itemsize

    # ---- loop-invariant precomputation (once, outside the grid) ----
    w_dist = (-2.0 * kernels.astype(jnp.float32)).T.astype(cdt)              # (D, K)
    k_sq2d = jnp.sum(kernels.astype(jnp.float32) ** 2, axis=-1).reshape(1, K)  # f32
    w_mix_t = w_mix.T.astype(cdt)                                            # (D, K)
    b_mix2d = b_mix.astype(jnp.float32).reshape(1, K)
    w_out_t = w_out.T.astype(cdt)                                            # (K, O)
    b_out2d = b_out.astype(jnp.float32).reshape(1, O)

    # ---- tiling policy (VMEM-budgeted, megacore-aware) ----
    vmem_limit = _vmem_limit_bytes()
    if tm is None:
        tm = _choose_tm(D, K, O, itemsize, vmem_limit)
    tm = max(_SUBLANES, _round_up(tm, _SUBLANES))
    tm = min(tm, _round_up(M, _SUBLANES))             # never exceed the problem
    if M > _SUBLANES:                                 # >= 2 steps for 2 TCs (v7x)
        tm = min(tm, _round_up(_cdiv(M, 2), _SUBLANES))
    n_steps = _cdiv(M, tm)
    if n_steps > 1 and n_steps % 2 == 1:              # prefer an even step count
        tm = max(_SUBLANES, _round_up(_cdiv(M, n_steps + 1), _SUBLANES))
    M_pad = _round_up(M, tm)

    x2d = x.reshape(M, D).astype(cdt)
    if M_pad != M:
        x2d = jnp.pad(x2d, ((0, M_pad - M), (0, 0)))  # zero rows: sliced off below

    def build(single_buffer_weights):
        if single_buffer_weights:
            # Constant-index blocks: request a single VMEM buffer (they are not
            # re-DMA'd, so double-buffering them only wastes VMEM).
            def const_spec(shape):
                return pl.BlockSpec(shape, lambda i: (0, 0),
                                    pipeline_mode=pl.Buffered(1))
        else:
            def const_spec(shape):
                return pl.BlockSpec(shape, lambda i: (0, 0))
        return pl.pallas_call(
            _adaptive_kernel_layer_kernel,
            out_shape=jax.ShapeDtypeStruct((M_pad, O), x.dtype),
            grid_spec=pltpu.PrefetchScalarGridSpec(
                num_scalar_prefetch=0,
                grid=(M_pad // tm,),
                in_specs=[
                    pl.BlockSpec((tm, D), lambda i: (i, 0)),   # x rows (pipelined)
                    const_spec((D, K)),                        # -2 * kernels^T
                    const_spec((1, K)),                        # ||k||^2
                    const_spec((D, K)),                        # mixer weight^T
                    const_spec((1, K)),                        # mixer bias
                    const_spec((K, O)),                        # out-proj weight^T
                    const_spec((1, O)),                        # out-proj bias
                ],
                out_specs=pl.BlockSpec((tm, O), lambda i: (i, 0)),
            ),
            compiler_params=pltpu.CompilerParams(
                # 1-D row grid: pipelines the x DMA against compute and shards
                # across TensorCores on v7x (grid has >= 2 steps when M > 8).
                dimension_semantics=("parallel",),
                vmem_limit_bytes=vmem_limit,
            ),
        )

    args = (x2d, w_dist, k_sq2d, w_mix_t, b_mix2d, w_out_t, b_out2d)
    try:
        out2d = build(single_buffer_weights=True)(*args)
    except Exception:
        # pipeline_mode=pl.Buffered(1) not accepted by this JAX/Mosaic build;
        # fall back to default (double-buffered) constant blocks.
        out2d = build(single_buffer_weights=False)(*args)

    return out2d[:M].reshape(B, S, O)


def _reference(x, kernels, w_mix, b_mix, w_out, b_out):
    # pure-JAX reference mirroring the PyTorch forward
    x_expanded = x[:, :, None, :]                          # (B,S,1,D)
    k_expanded = kernels[None, None, :, :]                 # (1,1,K,D)
    dist = jnp.sum((x_expanded - k_expanded) ** 2, axis=-1)
    act = jnp.exp(-dist)
    logits = jnp.einsum('bsd,kd->bsk', x, w_mix) + b_mix
    mix = jax.nn.softmax(logits, axis=-1)
    weighted = act * mix
    return jnp.einsum('bsk,ok->bso', weighted, w_out) + b_out


if __name__ == "__main__":
    # small shapes consistent with the module
    B, S, D = 2, 8, 32          # batch, seq_len, input_dim
    K, O = 16, 8                # num_kernels, output_dim

    key = jax.random.PRNGKey(0)
    kx, kk, kwm, kbm, kwo, kbo = jax.random.split(key, 6)

    x = jax.random.normal(kx, (B, S, D), dtype=jnp.float32)
    kernels = jax.random.normal(kk, (K, D), dtype=jnp.float32)           # torch.randn
    w_mix = jax.random.uniform(kwm, (K, D), jnp.float32, -1.0, 1.0) / jnp.sqrt(D)
    b_mix = jax.random.uniform(kbm, (K,), jnp.float32, -1.0, 1.0) / jnp.sqrt(D)
    w_out = jax.random.uniform(kwo, (O, K), jnp.float32, -1.0, 1.0) / jnp.sqrt(K)
    b_out = jax.random.uniform(kbo, (O,), jnp.float32, -1.0, 1.0) / jnp.sqrt(K)

    out = adaptive_kernel_layer(x, kernels, w_mix, b_mix, w_out, b_out)
    out = jax.block_until_ready(out)

    ref = _reference(x, kernels, w_mix, b_mix, w_out, b_out)
    assert out.shape == (B, S, O)
    # Tolerance loosened slightly vs. 1e-4: the softmax denominator uses the
    # EUP approximate reciprocal (pl.reciprocal(approx=True)) per perf review.
    assert jnp.allclose(out, ref, atol=2e-3, rtol=2e-3), "mismatch vs reference"

    print("KERNEL_OK")
</pallas_src>

<mosaic_0001>
module attributes {stable_mosaic.version = 11 : i64} {
  func.func @_adaptive_kernel_layer_kernel(%arg0: i32, %arg1: memref<8x32xf32, #tpu.memory_space<vmem>>, %arg2: memref<32x16xf32, #tpu.memory_space<vmem>>, %arg3: memref<1x16xf32, #tpu.memory_space<vmem>>, %arg4: memref<32x16xf32, #tpu.memory_space<vmem>>, %arg5: memref<1x16xf32, #tpu.memory_space<vmem>>, %arg6: memref<16x8xf32, #tpu.memory_space<vmem>>, %arg7: memref<1x8xf32, #tpu.memory_space<vmem>>, %arg8: memref<8x8xf32, #tpu.memory_space<vmem>>) attributes {dimension_semantics = [#tpu.dimension_semantics<parallel>], iteration_bounds = array<i64: 2>, scalar_prefetch = 0 : i64, scratch_operands = 0 : i64, tpu.core_type = #tpu.core_type<tc>, window_params = [{transform_indices = @transform_0, window_bounds = array<i64: 8, 32>}, {pipeline_mode = #tpu.pipeline_mode<synchronous>, transform_indices = @transform_1, window_bounds = array<i64: 32, 16>}, {pipeline_mode = #tpu.pipeline_mode<synchronous>, transform_indices = @transform_2, window_bounds = array<i64: 1, 16>}, {pipeline_mode = #tpu.pipeline_mode<synchronous>, transform_indices = @transform_3, window_bounds = array<i64: 32, 16>}, {pipeline_mode = #tpu.pipeline_mode<synchronous>, transform_indices = @transform_4, window_bounds = array<i64: 1, 16>}, {pipeline_mode = #tpu.pipeline_mode<synchronous>, transform_indices = @transform_5, window_bounds = array<i64: 16, 8>}, {pipeline_mode = #tpu.pipeline_mode<synchronous>, transform_indices = @transform_6, window_bounds = array<i64: 1, 8>}, {transform_indices = @transform_7, window_bounds = array<i64: 8, 8>}]} {
    %c0 = arith.constant 0 : index
    %c0_0 = arith.constant 0 : index
    %0 = vector.load %arg1[%c0, %c0_0] : memref<8x32xf32, #tpu.memory_space<vmem>>, vector<8x32xf32>
    %c0_1 = arith.constant 0 : index
    %c0_2 = arith.constant 0 : index
    %1 = vector.load %arg2[%c0_1, %c0_2] : memref<32x16xf32, #tpu.memory_space<vmem>>, vector<32x16xf32>
    %cst = arith.constant dense<0.000000e+00> : vector<8x16xf32>
    %2 = tpu.matmul %0, %1, %cst {dimension_numbers = #tpu.dot_dimension_numbers<[1], [0], [0], [1], [0, 0, 1, 1], [], []>} : vector<8x32xf32>, vector<32x16xf32>, vector<8x16xf32> -> vector<8x16xf32>
    %3 = arith.mulf %0, %0 : vector<8x32xf32>
    %cst_3 = arith.constant dense<0.000000e+00> : vector<8xf32>
    %4 = vector.multi_reduction <add>, %3, %cst_3 [1] : vector<8x32xf32> to vector<8xf32>
    %5 = vector.shape_cast %4 : vector<8xf32> to vector<8x1xf32>
    %6 = vector.broadcast %5 : vector<8x1xf32> to vector<8x16xf32>
    %7 = arith.addf %6, %2 : vector<8x16xf32>
    %c0_4 = arith.constant 0 : index
    %c0_5 = arith.constant 0 : index
    %8 = vector.load %arg3[%c0_4, %c0_5] : memref<1x16xf32, #tpu.memory_space<vmem>>, vector<1x16xf32>
    %9 = vector.broadcast %8 : vector<1x16xf32> to vector<8x16xf32>
    %10 = arith.addf %7, %9 : vector<8x16xf32>
    %cst_6 = arith.constant 0.000000e+00 : f32
    %11 = vector.broadcast %cst_6 : f32 to vector<8x16xf32>
    %12 = arith.maximumf %10, %11 : vector<8x16xf32>
    %c0_7 = arith.constant 0 : index
    %c0_8 = arith.constant 0 : index
    %13 = vector.load %arg4[%c0_7, %c0_8] : memref<32x16xf32, #tpu.memory_space<vmem>>, vector<32x16xf32>
    %cst_9 = arith.constant dense<0.000000e+00> : vector<8x16xf32>
    %14 = tpu.matmul %0, %13, %cst_9 {dimension_numbers = #tpu.dot_dimension_numbers<[1], [0], [0], [1], [0, 0, 1, 1], [], []>} : vector<8x32xf32>, vector<32x16xf32>, vector<8x16xf32> -> vector<8x16xf32>
    %c0_10 = arith.constant 0 : index
    %c0_11 = arith.constant 0 : index
    %15 = vector.load %arg5[%c0_10, %c0_11] : memref<1x16xf32, #tpu.memory_space<vmem>>, vector<1x16xf32>
    %16 = vector.broadcast %15 : vector<1x16xf32> to vector<8x16xf32>
    %17 = arith.addf %14, %16 : vector<8x16xf32>
    %cst_12 = arith.constant dense<0xFF800000> : vector<8xf32>
    %18 = vector.multi_reduction <maximumf>, %17, %cst_12 [1] : vector<8x16xf32> to vector<8xf32>
    %19 = vector.shape_cast %18 : vector<8xf32> to vector<8x1xf32>
    %20 = vector.broadcast %19 : vector<8x1xf32> to vector<8x16xf32>
    %21 = arith.subf %17, %20 : vector<8x16xf32>
    %22 = math.exp %21 : vector<8x16xf32>
    %cst_13 = arith.constant dense<0.000000e+00> : vector<8xf32>
    %23 = vector.multi_reduction <add>, %22, %cst_13 [1] : vector<8x16xf32> to vector<8xf32>
    %24 = vector.shape_cast %23 : vector<8xf32> to vector<8x1xf32>
    %25 = tpu.reciprocal %24 {approx = true} : vector<8x1xf32> -> vector<8x1xf32>
    %26 = vector.broadcast %19 : vector<8x1xf32> to vector<8x16xf32>
    %27 = arith.subf %17, %26 : vector<8x16xf32>
    %28 = arith.subf %27, %12 : vector<8x16xf32>
    %29 = math.exp %28 : vector<8x16xf32>
    %30 = vector.broadcast %25 : vector<8x1xf32> to vector<8x16xf32>
    %31 = arith.mulf %29, %30 : vector<8x16xf32>
    %c0_14 = arith.constant 0 : index
    %c0_15 = arith.constant 0 : index
    %32 = vector.load %arg6[%c0_14, %c0_15] : memref<16x8xf32, #tpu.memory_space<vmem>>, vector<16x8xf32>
    %cst_16 = arith.constant dense<0.000000e+00> : vector<8x8xf32>
    %33 = tpu.matmul %31, %32, %cst_16 {dimension_numbers = #tpu.dot_dimension_numbers<[1], [0], [0], [1], [0, 0, 1, 1], [], []>} : vector<8x16xf32>, vector<16x8xf32>, vector<8x8xf32> -> vector<8x8xf32>
    %c0_17 = arith.constant 0 : index
    %c0_18 = arith.constant 0 : index
    %34 = vector.load %arg7[%c0_17, %c0_18] : memref<1x8xf32, #tpu.memory_space<vmem>>, vector<1x8xf32>
    %35 = vector.broadcast %34 : vector<1x8xf32> to vector<8x8xf32>
    %36 = arith.addf %33, %35 : vector<8x8xf32>
    %c0_19 = arith.constant 0 : index
    %c0_20 = arith.constant 0 : index
    %37 = vector.load %arg8[%c0_19, %c0_20] : memref<8x8xf32, #tpu.memory_space<vmem>>, vector<8x8xf32>
    tpu.vector_store %arg8[%c0_19, %c0_20], %36 {strides = array<i32>} : memref<8x8xf32, #tpu.memory_space<vmem>>, vector<8x8xf32>,
    return
  }
  func.func @transform_0(%arg0: i32) -> (i32, i32) {
    %c0_i32 = arith.constant 0 : i32
    %c0_i32_0 = arith.constant 0 : i32
    return %arg0, %c0_i32 : i32, i32
  }
  func.func @transform_1(%arg0: i32) -> (i32, i32) {
    %c0_i32 = arith.constant 0 : i32
    %c0_i32_0 = arith.constant 0 : i32
    %c0_i32_1 = arith.constant 0 : i32
    return %c0_i32, %c0_i32_0 : i32, i32
  }
  func.func @transform_2(%arg0: i32) -> (i32, i32) {
    %c0_i32 = arith.constant 0 : i32
    %c0_i32_0 = arith.constant 0 : i32
    %c0_i32_1 = arith.constant 0 : i32
    return %c0_i32, %c0_i32_0 : i32, i32
  }
  func.func @transform_3(%arg0: i32) -> (i32, i32) {
    %c0_i32 = arith.constant 0 : i32
    %c0_i32_0 = arith.constant 0 : i32
    %c0_i32_1 = arith.constant 0 : i32
    return %c0_i32, %c0_i32_0 : i32, i32
  }
  func.func @transform_4(%arg0: i32) -> (i32, i32) {
    %c0_i32 = arith.constant 0 : i32
    %c0_i32_0 = arith.constant 0 : i32
    %c0_i32_1 = arith.constant 0 : i32
    return %c0_i32, %c0_i32_0 : i32, i32
  }
  func.func @transform_5(%arg0: i32) -> (i32, i32) {
    %c0_i32 = arith.constant 0 : i32
    %c0_i32_0 = arith.constant 0 : i32
    %c0_i32_1 = arith.constant 0 : i32
    return %c0_i32, %c0_i32_0 : i32, i32
  }
  func.func @transform_6(%arg0: i32) -> (i32, i32) {
    %c0_i32 = arith.constant 0 : i32
    %c0_i32_0 = arith.constant 0 : i32
    %c0_i32_1 = arith.constant 0 : i32
    return %c0_i32, %c0_i32_0 : i32, i32
  }
  func.func @transform_7(%arg0: i32) -> (i32, i32) {
    %c0_i32 = arith.constant 0 : i32
    %c0_i32_0 = arith.constant 0 : i32
    return %arg0, %c0_i32 : i32, i32
  }
}

module attributes {stable_mosaic.version = 11 : i64} {
  func.func @_adaptive_kernel_layer_kernel(%arg0: i32, %arg1: memref<8x32xf32, #tpu.memory_space<vmem>>, %arg2: memref<32x16xf32, #tpu.memory_space<vmem>>, %arg3: memref<1x16xf32, #tpu.memory_space<vmem>>, %arg4: memref<32x16xf32, #tpu.memory_space<vmem>>, %arg5: memref<1x16xf32, #tpu.memory_space<vmem>>, %arg6: memref<16x8xf32, #tpu.memory_space<vmem>>, %arg7: memref<1x8xf32, #tpu.memory_space<vmem>>, %arg8: memref<8x8xf32, #tpu.memory_space<vmem>>) attributes {dimension_semantics = [#tpu.dimension_semantics<parallel>], iteration_bounds = array<i64: 2>, scalar_prefetch = 0 : i64, scratch_operands = 0 : i64, tpu.core_type = #tpu.core_type<tc>, window_params = [{transform_indices = @transform_0, window_bounds = array<i64: 8, 32>}, {pipeline_mode = #tpu.pipeline_mode<synchronous>, transform_indices = @transform_1, window_bounds = array<i64: 32, 16>}, {pipeline_mode = #tpu.pipeline_mode<synchronous>, transform_indices = @transform_2, window_bounds = array<i64: 1, 16>}, {pipeline_mode = #tpu.pipeline_mode<synchronous>, transform_indices = @transform_3, window_bounds = array<i64: 32, 16>}, {pipeline_mode = #tpu.pipeline_mode<synchronous>, transform_indices = @transform_4, window_bounds = array<i64: 1, 16>}, {pipeline_mode = #tpu.pipeline_mode<synchronous>, transform_indices = @transform_5, window_bounds = array<i64: 16, 8>}, {pipeline_mode = #tpu.pipeline_mode<synchronous>, transform_indices = @transform_6, window_bounds = array<i64: 1, 8>}, {transform_indices = @transform_7, window_bounds = array<i64: 8, 8>}]} {
    %c0 = arith.constant 0 : index
    %c0_0 = arith.constant 0 : index
    %0 = vector.load %arg1[%c0, %c0_0] : memref<8x32xf32, #tpu.memory_space<vmem>>, vector<8x32xf32>
    %c0_1 = arith.constant 0 : index
    %c0_2 = arith.constant 0 : index
    %1 = vector.load %arg2[%c0_1, %c0_2] : memref<32x16xf32, #tpu.memory_space<vmem>>, vector<32x16xf32>
    %cst = arith.constant dense<0.000000e+00> : vector<8x16xf32>
    %2 = tpu.matmul %0, %1, %cst {dimension_numbers = #tpu.dot_dimension_numbers<[1], [0], [0], [1], [0, 0, 1, 1], [], []>} : vector<8x32xf32>, vector<32x16xf32>, vector<8x16xf32> -> vector<8x16xf32>
    %3 = arith.mulf %0, %0 : vector<8x32xf32>
    %cst_3 = arith.constant dense<0.000000e+00> : vector<8xf32>
    %4 = vector.multi_reduction <add>, %3, %cst_3 [1] : vector<8x32xf32> to vector<8xf32>
    %5 = vector.shape_cast %4 : vector<8xf32> to vector<8x1xf32>
    %6 = vector.broadcast %5 : vector<8x1xf32> to vector<8x16xf32>
    %7 = arith.addf %6, %2 : vector<8x16xf32>
    %c0_4 = arith.constant 0 : index
    %c0_5 = arith.constant 0 : index
    %8 = vector.load %arg3[%c0_4, %c0_5] : memref<1x16xf32, #tpu.memory_space<vmem>>, vector<1x16xf32>
    %9 = vector.broadcast %8 : vector<1x16xf32> to vector<8x16xf32>
    %10 = arith.addf %7, %9 : vector<8x16xf32>
    %cst_6 = arith.constant 0.000000e+00 : f32
    %11 = vector.broadcast %cst_6 : f32 to vector<8x16xf32>
    %12 = arith.maximumf %10, %11 : vector<8x16xf32>
    %c0_7 = arith.constant 0 : index
    %c0_8 = arith.constant 0 : index
    %13 = vector.load %arg4[%c0_7, %c0_8] : memref<32x16xf32, #tpu.memory_space<vmem>>, vector<32x16xf32>
    %cst_9 = arith.constant dense<0.000000e+00> : vector<8x16xf32>
    %14 = tpu.matmul %0, %13, %cst_9 {dimension_numbers = #tpu.dot_dimension_numbers<[1], [0], [0], [1], [0, 0, 1, 1], [], []>} : vector<8x32xf32>, vector<32x16xf32>, vector<8x16xf32> -> vector<8x16xf32>
    %c0_10 = arith.constant 0 : index
    %c0_11 = arith.constant 0 : index
    %15 = vector.load %arg5[%c0_10, %c0_11] : memref<1x16xf32, #tpu.memory_space<vmem>>, vector<1x16xf32>
    %16 = vector.broadcast %15 : vector<1x16xf32> to vector<8x16xf32>
    %17 = arith.addf %14, %16 : vector<8x16xf32>
    %cst_12 = arith.constant dense<0xFF800000> : vector<8xf32>
    %18 = vector.multi_reduction <maximumf>, %17, %cst_12 [1] : vector<8x16xf32> to vector<8xf32>
    %19 = vector.shape_cast %18 : vector<8xf32> to vector<8x1xf32>
    %20 = vector.broadcast %19 : vector<8x1xf32> to vector<8x16xf32>
    %21 = arith.subf %17, %20 : vector<8x16xf32>
    %22 = math.exp %21 : vector<8x16xf32>
    %cst_13 = arith.constant dense<0.000000e+00> : vector<8xf32>
    %23 = vector.multi_reduction <add>, %22, %cst_13 [1] : vector<8x16xf32> to vector<8xf32>
    %24 = vector.shape_cast %23 : vector<8xf32> to vector<8x1xf32>
    %25 = tpu.reciprocal %24 {approx = true} : vector<8x1xf32> -> vector<8x1xf32>
    %26 = vector.broadcast %19 : vector<8x1xf32> to vector<8x16xf32>
    %27 = arith.subf %17, %26 : vector<8x16xf32>
    %28 = arith.subf %27, %12 : vector<8x16xf32>
    %29 = math.exp %28 : vector<8x16xf32>
    %30 = vector.broadcast %25 : vector<8x1xf32> to vector<8x16xf32>
    %31 = arith.mulf %29, %30 : vector<8x16xf32>
    %c0_14 = arith.constant 0 : index
    %c0_15 = arith.constant 0 : index
    %32 = vector.load %arg6[%c0_14, %c0_15] : memref<16x8xf32, #tpu.memory_space<vmem>>, vector<16x8xf32>
    %cst_16 = arith.constant dense<0.000000e+00> : vector<8x8xf32>
    %33 = tpu.matmul %31, %32, %cst_16 {dimension_numbers = #tpu.dot_dimension_numbers<[1], [0], [0], [1], [0, 0, 1, 1], [], []>} : vector<8x16xf32>, vector<16x8xf32>, vector<8x8xf32> -> vector<8x8xf32>
    %c0_17 = arith.constant 0 : index
    %c0_18 = arith.constant 0 : index
    %34 = vector.load %arg7[%c0_17, %c0_18] : memref<1x8xf32, #tpu.memory_space<vmem>>, vector<1x8xf32>
    %35 = vector.broadcast %34 : vector<1x8xf32> to vector<8x8xf32>
    %36 = arith.addf %33, %35 : vector<8x8xf32>
    %c0_19 = arith.constant 0 : index
    %c0_20 = arith.constant 0 : index
    %37 = vector.load %arg8[%c0_19, %c0_20] : memref<8x8xf32, #tpu.memory_space<vmem>>, vector<8x8xf32>
    tpu.vector_store %arg8[%c0_19, %c0_20], %36 {strides = array<i32>} : memref<8x8xf32, #tpu.memory_space<vmem>>, vector<8x8xf32>,
    return
  }
  func.func @transform_0(%arg0: i32) -> (i32, i32) {
    %c0_i32 = arith.constant 0 : i32
    %c0_i32_0 = arith.constant 0 : i32
    return %arg0, %c0_i32 : i32, i32
  }
  func.func @transform_1(%arg0: i32) -> (i32, i32) {
    %c0_i32 = arith.constant 0 : i32
    %c0_i32_0 = arith.constant 0 : i32
    %c0_i32_1 = arith.constant 0 : i32
    return %c0_i32, %c0_i32_0 : i32, i32
  }
  func.func @transform_2(%arg0: i32) -> (i32, i32) {
    %c0_i32 = arith.constant 0 : i32
    %c0_i32_0 = arith.constant 0 : i32
    %c0_i32_1 = arith.constant 0 : i32
    return %c0_i32, %c0_i32_0 : i32, i32
  }
  func.func @transform_3(%arg0: i32) -> (i32, i32) {
    %c0_i32 = arith.constant 0 : i32
    %c0_i32_0 = arith.constant 0 : i32
    %c0_i32_1 = arith.constant 0 : i32
    return %c0_i32, %c0_i32_0 : i32, i32
  }
  func.func @transform_4(%arg0: i32) -> (i32, i32) {
    %c0_i32 = arith.constant 0 : i32
    %c0_i32_0 = arith.constant 0 : i32
    %c0_i32_1 = arith.constant 0 : i32
    return %c0_i32, %c0_i32_0 : i32, i32
  }
  func.func @transform_5(%arg0: i32) -> (i32, i32) {
    %c0_i32 = arith.constant 0 : i32
    %c0_i32_0 = arith.constant 0 : i32
    %c0_i32_1 = arith.constant 0 : i32
    return %c0_i32, %c0_i32_0 : i32, i32
  }
  func.func @transform_6(%arg0: i32) -> (i32, i32) {
    %c0_i32 = arith.constant 0 : i32
    %c0_i32_0 = arith.constant 0 : i32
    %c0_i32_1 = arith.constant 0 : i32
    return %c0_i32, %c0_i32_0 : i32, i32
  }
  func.func @transform_7(%arg0: i32) -> (i32, i32) {
    %c0_i32 = arith.constant 0 : i32
    %c0_i32_0 = arith.constant 0 : i32
    return %arg0, %c0_i32 : i32, i32
  }
}

</mosaic_0001>

<llo_original>
// kernel: tpu_custom_call.1
$region0: #{tpu_custom_call.1}
  #allocation0 [shape = 'u32[]', space=smem, size = 0x4, offset = 0x4, fixed_abs, tag = 'smem constant byte address 0x4 - core index']
  #allocation1 [shape = 'u32[72,128]{1,0:T(1,128)}', space=vmem, size = 0x9000, scoped, tag = 'internal scratch']
  %s0 = inlined_call_operand.vmem [shape: f32[16,32], index: 0, kind: input, shape index: {}]
  %s1 = inlined_call_operand.vmem [shape: f32[32,16], index: 1, kind: input, shape index: {}]
  %s2 = inlined_call_operand.vmem [shape: f32[1,16], index: 2, kind: input, shape index: {}]
  %s3 = inlined_call_operand.vmem [shape: f32[32,16], index: 3, kind: input, shape index: {}]
  %s4 = inlined_call_operand.vmem [shape: f32[1,16], index: 4, kind: input, shape index: {}]
  %s5 = inlined_call_operand.vmem [shape: f32[16,8], index: 5, kind: input, shape index: {}]
  %s6 = inlined_call_operand.vmem [shape: f32[1,8], index: 6, kind: input, shape index: {}]
  %s7 = inlined_call_operand.vmem [shape: f32[16,8], index: 7, kind: output, shape index: {}]
  %s8 = sld [smem:[#allocation0]]
  $region61: #{tpu_custom_call.1} parent=0
    _
  %s10 = ssub.s32 1, %s8
  %s11 = scalar_select 0, %s10, %s8
  loop: start=0, step=1, limit=4
  $region2: #{tpu_custom_call.1} parent=0 // loop_pre_header
    _
  $region3: #{tpu_custom_call.1} parent=0 // loop_header
    %s13 = sphi 0, %s17
    %p14 = scmp.ge.s32.totalorder %s13, 4
    %s23 = sphi 0, %s25
    %s26 = sphi 0, %s23
    %s27 = sphi 0, %s26
    %s43 = sphi 0, %s27
    %s47 = sphi 0, %s47
    %s49 = sphi 0, %s47
    %s50 = sphi 0, %s49
    %s64 = sphi 0, %s50
    %s68 = sphi 0, %s68
    %s70 = sphi 0, %s68
    %s71 = sphi 0, %s70
    %s85 = sphi 0, %s71
    %s89 = sphi 0, %s89
    %s91 = sphi 0, %s89
    %s92 = sphi 0, %s91
    %s106 = sphi 0, %s92
    %s110 = sphi 0, %s110
    %s112 = sphi 0, %s110
    %s113 = sphi 0, %s112
    %s127 = sphi 0, %s113
    %s131 = sphi 0, %s131
    %s133 = sphi 0, %s131
    %s134 = sphi 0, %s133
    %s148 = sphi 0, %s134
    %s152 = sphi 0, %s152
    %s154 = sphi 0, %s152
    %s155 = sphi 0, %s154
    %s169 = sphi 0, %s155
    %s175 = sphi 0, %s177
    %s178 = sphi 0, %s175
    %s179 = sphi 0, %s178
    %s195 = sphi 0, %s179
  $region4: #{tpu_custom_call.1} parent=0 // loop_header_branch
    %16 = sbr.rel (%p14) target = $region8
  $region5: #{tpu_custom_call.1} parent=0 // loop_body
    %s18 = ssub.s32 %s13, 1
    %s19 = ssub.s32 %s13, 2
    %s20 = sadd.s32 %s13, 1
    %s21 = ssub.s32 %s13, %s20
    %p22 = scmp.eq.s32.totalorder %s21, 0
    %s24 = sadd.s32 %s23, 1
    %s25 = scalar_select %p22, %s23, %s24
    %p28 = pneg %p22
    %p29 = scmp.eq.s32.totalorder %s13, 1
    %p30 = por %p28, %p29
    %p31 = scmp.ne.s32.totalorder %s23, %s26
    %p32 = scmp.eq.s32.totalorder %s13, 0
    %p33 = por %p31, %p32
    %p34 = scmp.ne.s32.totalorder %s23, %s26
    %p35 = scmp.eq.s32.totalorder %s18, 1
    %p36 = por %p34, %p35
    %p37 = scmp.ne.s32.totalorder %s26, %s27
    %p38 = scmp.eq.s32.totalorder %s18, 0
    %p39 = por %p37, %p38
    %p40 = scmp.ne.s32.totalorder %s26, %s27
    %p41 = scmp.eq.s32.totalorder %s19, 1
    %p42 = por %p40, %p41
    %p44 = scmp.ne.s32.totalorder %s27, %s43
    %p45 = scmp.eq.s32.totalorder %s19, 0
    %p46 = por %p44, %p45
    %s48 = sadd.s32 %s47, 1
    %p51 = scmp.eq.s32.totalorder %s13, 1
    %p52 = scmp.ne.s32.totalorder %s47, %s49
    %p53 = scmp.eq.s32.totalorder %s13, 0
    %p54 = por %p52, %p53
    %p55 = scmp.ne.s32.totalorder %s47, %s49
    %p56 = scmp.eq.s32.totalorder %s18, 1
    %p57 = por %p55, %p56
    %p58 = scmp.ne.s32.totalorder %s49, %s50
    %p59 = scmp.eq.s32.totalorder %s18, 0
    %p60 = por %p58, %p59
    %p61 = scmp.ne.s32.totalorder %s49, %s50
    %p62 = scmp.eq.s32.totalorder %s19, 1
    %p63 = por %p61, %p62
    %p65 = scmp.ne.s32.totalorder %s50, %s64
    %p66 = scmp.eq.s32.totalorder %s19, 0
    %p67 = por %p65, %p66
    %s69 = sadd.s32 %s68, 1
    %p72 = scmp.eq.s32.totalorder %s13, 1
    %p73 = scmp.ne.s32.totalorder %s68, %s70
    %p74 = scmp.eq.s32.totalorder %s13, 0
    %p75 = por %p73, %p74
    %p76 = scmp.ne.s32.totalorder %s68, %s70
    %p77 = scmp.eq.s32.totalorder %s18, 1
    %p78 = por %p76, %p77
    %p79 = scmp.ne.s32.totalorder %s70, %s71
    %p80 = scmp.eq.s32.totalorder %s18, 0
    %p81 = por %p79, %p80
    %p82 = scmp.ne.s32.totalorder %s70, %s71
    %p83 = scmp.eq.s32.totalorder %s19, 1
    %p84 = por %p82, %p83
    %p86 = scmp.ne.s32.totalorder %s71, %s85
    %p87 = scmp.eq.s32.totalorder %s19, 0
    %p88 = por %p86, %p87
    %s90 = sadd.s32 %s89, 1
    %p93 = scmp.eq.s32.totalorder %s13, 1
    %p94 = scmp.ne.s32.totalorder %s89, %s91
    %p95 = scmp.eq.s32.totalorder %s13, 0
    %p96 = por %p94, %p95
    %p97 = scmp.ne.s32.totalorder %s89, %s91
    %p98 = scmp.eq.s32.totalorder %s18, 1
    %p99 = por %p97, %p98
    %p100 = scmp.ne.s32.totalorder %s91, %s92
    %p101 = scmp.eq.s32.totalorder %s18, 0
    %p102 = por %p100, %p101
    %p103 = scmp.ne.s32.totalorder %s91, %s92
    %p104 = scmp.eq.s32.totalorder %s19, 1
    %p105 = por %p103, %p104
    %p107 = scmp.ne.s32.totalorder %s92, %s106
    %p108 = scmp.eq.s32.totalorder %s19, 0
    %p109 = por %p107, %p108
    %s111 = sadd.s32 %s110, 1
    %p114 = scmp.eq.s32.totalorder %s13, 1
    %p115 = scmp.ne.s32.totalorder %s110, %s112
    %p116 = scmp.eq.s32.totalorder %s13, 0
    %p117 = por %p115, %p116
    %p118 = scmp.ne.s32.totalorder %s110, %s112
    %p119 = scmp.eq.s32.totalorder %s18, 1
    %p120 = por %p118, %p119
    %p121 = scmp.ne.s32.totalorder %s112, %s113
    %p122 = scmp.eq.s32.totalorder %s18, 0
    %p123 = por %p121, %p122
    %p124 = scmp.ne.s32.totalorder %s112, %s113
    %p125 = scmp.eq.s32.totalorder %s19, 1
    %p126 = por %p124, %p125
    %p128 = scmp.ne.s32.totalorder %s113, %s127
    %p129 = scmp.eq.s32.totalorder %s19, 0
    %p130 = por %p128, %p129
    %s132 = sadd.s32 %s131, 1
    %p135 = scmp.eq.s32.totalorder %s13, 1
    %p136 = scmp.ne.s32.totalorder %s131, %s133
    %p137 = scmp.eq.s32.totalorder %s13, 0
    %p138 = por %p136, %p137
    %p139 = scmp.ne.s32.totalorder %s131, %s133
    %p140 = scmp.eq.s32.totalorder %s18, 1
    %p141 = por %p139, %p140
    %p142 = scmp.ne.s32.totalorder %s133, %s134
    %p143 = scmp.eq.s32.totalorder %s18, 0
    %p144 = por %p142, %p143
    %p145 = scmp.ne.s32.totalorder %s133, %s134
    %p146 = scmp.eq.s32.totalorder %s19, 1
    %p147 = por %p145, %p146
    %p149 = scmp.ne.s32.totalorder %s134, %s148
    %p150 = scmp.eq.s32.totalorder %s19, 0
    %p151 = por %p149, %p150
    %s153 = sadd.s32 %s152, 1
    %p156 = scmp.eq.s32.totalorder %s13, 1
    %p157 = scmp.ne.s32.totalorder %s152, %s154
    %p158 = scmp.eq.s32.totalorder %s13, 0
    %p159 = por %p157, %p158
    %p160 = scmp.ne.s32.totalorder %s152, %s154
    %p161 = scmp.eq.s32.totalorder %s18, 1
    %p162 = por %p160, %p161
    %p163 = scmp.ne.s32.totalorder %s154, %s155
    %p164 = scmp.eq.s32.totalorder %s18, 0
    %p165 = por %p163, %p164
    %p166 = scmp.ne.s32.totalorder %s154, %s155
    %p167 = scmp.eq.s32.totalorder %s19, 1
    %p168 = por %p166, %p167
    %p170 = scmp.ne.s32.totalorder %s155, %s169
    %p171 = scmp.eq.s32.totalorder %s19, 0
    %p172 = por %p170, %p171
    %s173 = ssub.s32 %s13, %s20
    %p174 = scmp.eq.s32.totalorder %s173, 0
    %s176 = sadd.s32 %s175, 1
    %s177 = scalar_select %p174, %s175, %s176
    %p180 = pneg %p174
    %p181 = scmp.eq.s32.totalorder %s13, 1
    %p182 = por %p180, %p181
    %p183 = scmp.ne.s32.totalorder %s175, %s178
    %p184 = scmp.eq.s32.totalorder %s13, 0
    %p185 = por %p183, %p184
    %p186 = scmp.ne.s32.totalorder %s175, %s178
    %p187 = scmp.eq.s32.totalorder %s18, 1
    %p188 = por %p186, %p187
    %p189 = scmp.ne.s32.totalorder %s178, %s179
    %p190 = scmp.eq.s32.totalorder %s18, 0
    %p191 = por %p189, %p190
    %p192 = scmp.ne.s32.totalorder %s178, %s179
    %p193 = scmp.eq.s32.totalorder %s19, 1
    %p194 = por %p192, %p193
    %p196 = scmp.ne.s32.totalorder %s179, %s195
    %p197 = scmp.eq.s32.totalorder %s19, 0
    %p198 = por %p196, %p197
    %p199 = scmp.le.s32.totalorder 1, %s13
    %p200 = scmp.lt.s32.totalorder %s13, 3
    %p201 = pnand %p199, %p200
    %p202 = pneg %p201
    // Predicated region
    $region9: #{tpu_custom_call.1} parent=5 // pred_check
      _
    $region10: #{tpu_custom_call.1} parent=5 // pred_check_branch
      %204 = sbr.rel (%p201) target = $region12
    $region11: #{tpu_custom_call.1} parent=5 // pred_region
      %s205 = ssub.s32 %s13, 1
      // Predicated region
      $region13: #{tpu_custom_call.1} parent=11 // pred_check
        %p206 = pneg %p60
      $region14: #{tpu_custom_call.1} parent=11 // pred_check_branch
        %208 = sbr.rel (%p206) target = $region16
      $region15: #{tpu_custom_call.1} parent=11 // pred_region
        _
      $region16: #{tpu_custom_call.1} parent=11 // pred_fallthru
        _
      // Predicated region
      $region17: #{tpu_custom_call.1} parent=11 // pred_check
        %p209 = pneg %p81
      $region18: #{tpu_custom_call.1} parent=11 // pred_check_branch
        %211 = sbr.rel (%p209) target = $region20
      $region19: #{tpu_custom_call.1} parent=11 // pred_region
        _
      $region20: #{tpu_custom_call.1} parent=11 // pred_fallthru
        _
      // Predicated region
      $region21: #{tpu_custom_call.1} parent=11 // pred_check
        %p212 = pneg %p102
      $region22: #{tpu_custom_call.1} parent=11 // pred_check_branch
        %214 = sbr.rel (%p212) target = $region24
      $region23: #{tpu_custom_call.1} parent=11 // pred_region
        _
      $region24: #{tpu_custom_call.1} parent=11 // pred_fallthru
        _
      // Predicated region
      $region25: #{tpu_custom_call.1} parent=11 // pred_check
        %p215 = pneg %p123
      $region26: #{tpu_custom_call.1} parent=11 // pred_check_branch
        %217 = sbr.rel (%p215) target = $region28
      $region27: #{tpu_custom_call.1} parent=11 // pred_region
        _
      $region28: #{tpu_custom_call.1} parent=11 // pred_fallthru
        _
      // Predicated region
      $region29: #{tpu_custom_call.1} parent=11 // pred_check
        %p218 = pneg %p144
      $region30: #{tpu_custom_call.1} parent=11 // pred_check_branch
        %220 = sbr.rel (%p218) target = $region32
      $region31: #{tpu_custom_call.1} parent=11 // pred_region
        _
      $region32: #{tpu_custom_call.1} parent=11 // pred_fallthru
        _
      // Predicated region
      $region33: #{tpu_custom_call.1} parent=11 // pred_check
        %p221 = pneg %p165
      $region34: #{tpu_custom_call.1} parent=11 // pred_check_branch
        %223 = sbr.rel (%p221) target = $region36
      $region35: #{tpu_custom_call.1} parent=11 // pred_region
        _
      $region36: #{tpu_custom_call.1} parent=11 // pred_fallthru
        _
    $region12: #{tpu_custom_call.1} parent=5 // pred_fallthru
      _
    %p224 = scmp.lt.s32.totalorder %s13, 2
    // Predicated region
    $region37: #{tpu_custom_call.1} parent=5 // pred_check
      %p225 = pneg %p224
    $region38: #{tpu_custom_call.1} parent=5 // pred_check_branch
      %227 = sbr.rel (%p225) target = $region40
    $region39: #{tpu_custom_call.1} parent=5 // pred_region
      // Predicated region
      $region41: #{tpu_custom_call.1} parent=39 // pred_check
        %p228 = pneg %p33
      $region42: #{tpu_custom_call.1} parent=39 // pred_check_branch
        %230 = sbr.rel (%p228) target = $region44
      $region43: #{tpu_custom_call.1} parent=39 // pred_region
        %p231 = scmp.lt.s32.totalorder %s13, 1
        %s232 = scalar_select %p231, %s13, 1
        %s233 = smul.addr %s232, 8
        %s234 = scalar_lea.vmem %s0, %s233
      $region44: #{tpu_custom_call.1} parent=39 // pred_fallthru
        _
    $region40: #{tpu_custom_call.1} parent=5 // pred_fallthru
      _
    %p235 = scmp.le.s32.totalorder 1, %s13
    %p236 = scmp.lt.s32.totalorder %s13, 3
    %p237 = pnand %p235, %p236
    %p238 = pneg %p237
    // Predicated region
    $region45: #{tpu_custom_call.1} parent=5 // pred_check
      _
    $region46: #{tpu_custom_call.1} parent=5 // pred_check_branch
      %240 = sbr.rel (%p237) target = $region48
    $region47: #{tpu_custom_call.1} parent=5 // pred_region
      %s241 = ssub.s32 %s13, 1
      %p242 = scmp.lt.s32.totalorder %s18, 1
      %s243 = scalar_select %p242, %s18, 1
      %s244 = smul.addr %s243, 8
      %s245 = scalar_lea.vmem %s0, %s244
      %p246 = pneg %p39
      %p247 = pneg %p36
      %p248 = pneg %p60
      %p249 = pneg %p57
      %p250 = pneg %p81
      %p251 = pneg %p78
      %p252 = pneg %p102
      %p253 = pneg %p99
      %p254 = pneg %p123
      %p255 = pneg %p120
      %p256 = pneg %p144
      %p257 = pneg %p141
      %p258 = pneg %p165
      %p259 = pneg %p162
      %p260 = pneg %p191
      %p261 = pneg %p188
      %p262 = scmp.lt.s32.totalorder %s18, 1
      %s263 = scalar_select %p262, %s18, 1
      %s264 = smul.addr %s263, 8
      %s265 = scalar_lea.vmem %s7, %s264
      %p266 = scmp.lt.s32.totalorder %s18, 1
      %s267 = scalar_select %p266, %s18, 1
      %s268 = smul.addr %s267, 8
      %s269 = scalar_lea.vmem %s0, %s268
      %p270 = scmp.lt.s32.totalorder %s18, 1
      %s271 = scalar_select %p270, %s18, 1
      %s272 = smul.addr %s271, 8
      %s273 = scalar_lea.vmem %s7, %s272
      %v274 = vld [vmem:[%s269] sm:$0xff]
      %v275 = vld [vmem:[%s1] sm:$0xff]
      %v276 = vld [vmem:[%s1 + $0x8] sm:$0xff]
      %v277 = vld [vmem:[%s1 + $0x10] sm:$0xff]
      %v278 = vld [vmem:[%s1 + $0x18] sm:$0xff]
      %vm279 = vcmask 261120
      %v281 = vsel %vm279, %v274, 0
      %283 = vmatpush.msra.mxu0 0.0
      %284 = vmatpush.msra.mxu0 0.0
      %285 = vmatpush.msra.mxu0 0.0
      %286 = vmatpush.msra.mxu0 0.0
      %287 = vmatpush.msra.mxu0 0.0
      %288 = vmatpush.msra.mxu0 0.0
      %289 = vmatpush.msra.mxu0 0.0
      %290 = vmatpush.msra.mxu0 0.0
      %291 = vmatpush.msra.mxu0 0.0
      %292 = vmatpush.msra.mxu0 0.0
      %293 = vmatpush.msra.mxu0 0.0
      %294 = vmatpush.msra.mxu0 0.0
      %295 = vmatpush.msra.mxu0 %v278
      %296 = vmatpush.msra.mxu0 %v277
      %297 = vmatpush.msra.mxu0 %v276
      %298 = vmatpush.msra.mxu0 %v275
      %299 = vmatmul.f32.gmra.mxu0 %v281
      %v300 = vpop.f32.mrf.mxu0
      %v301 = vadd.f32 0.0, %v300
      %302 = vdwg.mxu0
      %v303 = vmul.f32 %v274, %v274
      %v304 = vsel %vm279, %v303, 0.0
      %305 = vadd.xlane.f32.xlu0 %v304
      %v306 = vpop.xlane.xlu0 %305
      %v307 = vadd.f32 %v306, %v301
      %v308 = vld [vmem:[%s2] sm:$0x1]
      %v310 = vperm.slane %v308, 0
      %v312 = vadd.f32 %v307, %v310
      %v313 = vmax.f32 %v312, 0.0
      %v314 = vld [vmem:[%s3] sm:$0xff]
      %v315 = vld [vmem:[%s3 + $0x8] sm:$0xff]
      %v316 = vld [vmem:[%s3 + $0x10] sm:$0xff]
      %v317 = vld [vmem:[%s3 + $0x18] sm:$0xff]
      %v318 = vld [vmem:[%s4] sm:$0x1]
      %v320 = vperm.slane %v318, 0
      %322 = vmatpush.msra.mxu0 0.0
      %323 = vmatpush.msra.mxu0 0.0
      %324 = vmatpush.msra.mxu0 0.0
      %325 = vmatpush.msra.mxu0 0.0
      %326 = vmatpush.msra.mxu0 0.0
      %327 = vmatpush.msra.mxu0 0.0
      %328 = vmatpush.msra.mxu0 0.0
      %329 = vmatpush.msra.mxu0 0.0
      %330 = vmatpush.msra.mxu0 0.0
      %331 = vmatpush.msra.mxu0 0.0
      %332 = vmatpush.msra.mxu0 0.0
      %333 = vmatpush.msra.mxu0 0.0
      %334 = vmatpush.msra.mxu0 %v317
      %335 = vmatpush.msra.mxu0 %v316
      %336 = vmatpush.msra.mxu0 %v315
      %337 = vmatpush.msra.mxu0 %v314
      %338 = vmatmul.f32.gmra.mxu0 %v281
      %v339 = vpop.f32.mrf.mxu0
      %v340 = vadd.f32 %v320, %v339
      %341 = vdwg.mxu0
      %vm342 = vcmask 130048
      %v343 = vsel %vm342, %v340, -inf
      %344 = vmax.xlane.f32.xlu0 %v343
      %v345 = vpop.xlane.xlu0 %344
      %v346 = vsub.f32 %v340, %v345
      %v347 = vmul.f32 %v346, 1.442695
      %v348 = vpow.pop %v347
      %v349 = vsel %vm342, %v348, 0.0
      %350 = vadd.xlane.f32.xlu0 %v349
      %v351 = vpop.xlane.xlu0 %350
      %v352 = vrcp.pop %v351
      %v353 = vsub.f32 %v346, %v313
      %v354 = vmul.f32 %v353, 1.442695
      %v355 = vpow.pop %v354
      %v356 = vmul.f32 %v355, %v352
      %v357 = vld [vmem:[%s5] sm:$0xff]
      %v358 = vld [vmem:[%s5 + $0x8] sm:$0xff]
      %v359 = vld [vmem:[%s6] sm:$0x1]
      %v361 = vperm.slane %v359, 0
      %v364 = vsel %vm342, %v356, 0
      %366 = vmatpush.msra.mxu0 0.0
      %367 = vmatpush.msra.mxu0 0.0
      %368 = vmatpush.msra.mxu0 0.0
      %369 = vmatpush.msra.mxu0 0.0
      %370 = vmatpush.msra.mxu0 0.0
      %371 = vmatpush.msra.mxu0 0.0
      %372 = vmatpush.msra.mxu0 0.0
      %373 = vmatpush.msra.mxu0 0.0
      %374 = vmatpush.msra.mxu0 0.0
      %375 = vmatpush.msra.mxu0 0.0
      %376 = vmatpush.msra.mxu0 0.0
      %377 = vmatpush.msra.mxu0 0.0
      %378 = vmatpush.msra.mxu0 0.0
      %379 = vmatpush.msra.mxu0 0.0
      %380 = vmatpush.msra.mxu0 %v358
      %381 = vmatpush.msra.mxu0 %v357
      %382 = vmatmul.f32.gmra.mxu0 %v364
      %v383 = vpop.f32.mrf.mxu0
      %v384 = vadd.f32 %v361, %v383
      %385 = vdwg.mxu0
      %vm386 = vcmask 64512
      %387 = vst.msk [vmem:[%s273] sm:$0xff] %vm386, %v384
      %p388 = scmp.lt.s32.totalorder %s18, 1
      %s389 = scalar_select %p388, %s18, 1
      %s390 = smul.addr %s389, 8
      %s391 = scalar_lea.vmem %s7, %s390
      // Predicated region
      $region49: #{tpu_custom_call.1} parent=47 // pred_check
        %p392 = pneg %p188
      $region50: #{tpu_custom_call.1} parent=47 // pred_check_branch
        %394 = sbr.rel (%p392) target = $region52
      $region51: #{tpu_custom_call.1} parent=47 // pred_region
        _
      $region52: #{tpu_custom_call.1} parent=47 // pred_fallthru
        _
    $region48: #{tpu_custom_call.1} parent=5 // pred_fallthru
      _
    %p395 = scmp.le.s32.totalorder 2, %s13
    // Predicated region
    $region53: #{tpu_custom_call.1} parent=5 // pred_check
      %p396 = pneg %p395
    $region54: #{tpu_custom_call.1} parent=5 // pred_check_branch
      %398 = sbr.rel (%p396) target = $region56
    $region55: #{tpu_custom_call.1} parent=5 // pred_region
      %s399 = ssub.s32 %s13, 2
      // Predicated region
      $region57: #{tpu_custom_call.1} parent=55 // pred_check
        %p400 = pneg %p194
      $region58: #{tpu_custom_call.1} parent=55 // pred_check_branch
        %402 = sbr.rel (%p400) target = $region60
      $region59: #{tpu_custom_call.1} parent=55 // pred_region
        %p403 = scmp.lt.s32.totalorder %s19, 1
        %s404 = scalar_select %p403, %s19, 1
        %s405 = smul.addr %s404, 8
        %s406 = scalar_lea.vmem %s7, %s405
      $region60: #{tpu_custom_call.1} parent=55 // pred_fallthru
        _
    $region56: #{tpu_custom_call.1} parent=5 // pred_fallthru
      _
  $region6: #{tpu_custom_call.1} parent=0 // loop_footer
    %s17 = sadd.s32 1, %s13
  $region7: #{tpu_custom_call.1} parent=0 // loop_footer_branch
    %12 = sbr.rel target = $region3
  $region8: #{tpu_custom_call.1} parent=0 // loop_exit
    _

// kernel: tpu_custom_call.1
$region0: #{tpu_custom_call.1}
  #allocation0 [shape = 'u32[]', space=smem, size = 0x4, offset = 0x4, fixed_abs, tag = 'smem constant byte address 0x4 - core index']
  #allocation1 [shape = 'u32[72,128]{1,0:T(1,128)}', space=vmem, size = 0x9000, scoped, tag = 'internal scratch']
  %s0 = inlined_call_operand.vmem [shape: f32[16,32], index: 0, kind: input, shape index: {}]
  %s1 = inlined_call_operand.vmem [shape: f32[32,16], index: 1, kind: input, shape index: {}]
  %s2 = inlined_call_operand.vmem [shape: f32[1,16], index: 2, kind: input, shape index: {}]
  %s3 = inlined_call_operand.vmem [shape: f32[32,16], index: 3, kind: input, shape index: {}]
  %s4 = inlined_call_operand.vmem [shape: f32[1,16], index: 4, kind: input, shape index: {}]
  %s5 = inlined_call_operand.vmem [shape: f32[16,8], index: 5, kind: input, shape index: {}]
  %s6 = inlined_call_operand.vmem [shape: f32[1,8], index: 6, kind: input, shape index: {}]
  %s7 = inlined_call_operand.vmem [shape: f32[16,8], index: 7, kind: output, shape index: {}]
  %s8 = sld [smem:[#allocation0]]
  $region61: #{tpu_custom_call.1} parent=0
    _
  %s10 = ssub.s32 1, %s8
  %s11 = scalar_select 0, %s10, %s8
  loop: start=0, step=1, limit=4
  $region2: #{tpu_custom_call.1} parent=0 // loop_pre_header
    _
  $region3: #{tpu_custom_call.1} parent=0 // loop_header
    %s13 = sphi 0, %s17
    %p14 = scmp.ge.s32.totalorder %s13, 4
    %s23 = sphi 0, %s25
    %s26 = sphi 0, %s23
    %s27 = sphi 0, %s26
    %s43 = sphi 0, %s27
    %s47 = sphi 0, %s47
    %s49 = sphi 0, %s47
    %s50 = sphi 0, %s49
    %s64 = sphi 0, %s50
    %s68 = sphi 0, %s68
    %s70 = sphi 0, %s68
    %s71 = sphi 0, %s70
    %s85 = sphi 0, %s71
    %s89 = sphi 0, %s89
    %s91 = sphi 0, %s89
    %s92 = sphi 0, %s91
    %s106 = sphi 0, %s92
    %s110 = sphi 0, %s110
    %s112 = sphi 0, %s110
    %s113 = sphi 0, %s112
    %s127 = sphi 0, %s113
    %s131 = sphi 0, %s131
    %s133 = sphi 0, %s131
    %s134 = sphi 0, %s133
    %s148 = sphi 0, %s134
    %s152 = sphi 0, %s152
    %s154 = sphi 0, %s152
    %s155 = sphi 0, %s154
    %s169 = sphi 0, %s155
    %s175 = sphi 0, %s177
    %s178 = sphi 0, %s175
    %s179 = sphi 0, %s178
    %s195 = sphi 0, %s179
  $region4: #{tpu_custom_call.1} parent=0 // loop_header_branch
    %16 = sbr.rel (%p14) target = $region8
  $region5: #{tpu_custom_call.1} parent=0 // loop_body
    %s18 = ssub.s32 %s13, 1
    %s19 = ssub.s32 %s13, 2
    %s20 = sadd.s32 %s13, 1
    %s21 = ssub.s32 %s13, %s20
    %p22 = scmp.eq.s32.totalorder %s21, 0
    %s24 = sadd.s32 %s23, 1
    %s25 = scalar_select %p22, %s23, %s24
    %p28 = pneg %p22
    %p29 = scmp.eq.s32.totalorder %s13, 1
    %p30 = por %p28, %p29
    %p31 = scmp.ne.s32.totalorder %s23, %s26
    %p32 = scmp.eq.s32.totalorder %s13, 0
    %p33 = por %p31, %p32
    %p34 = scmp.ne.s32.totalorder %s23, %s26
    %p35 = scmp.eq.s32.totalorder %s18, 1
    %p36 = por %p34, %p35
    %p37 = scmp.ne.s32.totalorder %s26, %s27
    %p38 = scmp.eq.s32.totalorder %s18, 0
    %p39 = por %p37, %p38
    %p40 = scmp.ne.s32.totalorder %s26, %s27
    %p41 = scmp.eq.s32.totalorder %s19, 1
    %p42 = por %p40, %p41
    %p44 = scmp.ne.s32.totalorder %s27, %s43
    %p45 = scmp.eq.s32.totalorder %s19, 0
    %p46 = por %p44, %p45
    %s48 = sadd.s32 %s47, 1
    %p51 = scmp.eq.s32.totalorder %s13, 1
    %p52 = scmp.ne.s32.totalorder %s47, %s49
    %p53 = scmp.eq.s32.totalorder %s13, 0
    %p54 = por %p52, %p53
    %p55 = scmp.ne.s32.totalorder %s47, %s49
    %p56 = scmp.eq.s32.totalorder %s18, 1
    %p57 = por %p55, %p56
    %p58 = scmp.ne.s32.totalorder %s49, %s50
    %p59 = scmp.eq.s32.totalorder %s18, 0
    %p60 = por %p58, %p59
    %p61 = scmp.ne.s32.totalorder %s49, %s50
    %p62 = scmp.eq.s32.totalorder %s19, 1
    %p63 = por %p61, %p62
    %p65 = scmp.ne.s32.totalorder %s50, %s64
    %p66 = scmp.eq.s32.totalorder %s19, 0
    %p67 = por %p65, %p66
    %s69 = sadd.s32 %s68, 1
    %p72 = scmp.eq.s32.totalorder %s13, 1
    %p73 = scmp.ne.s32.totalorder %s68, %s70
    %p74 = scmp.eq.s32.totalorder %s13, 0
    %p75 = por %p73, %p74
    %p76 = scmp.ne.s32.totalorder %s68, %s70
    %p77 = scmp.eq.s32.totalorder %s18, 1
    %p78 = por %p76, %p77
    %p79 = scmp.ne.s32.totalorder %s70, %s71
    %p80 = scmp.eq.s32.totalorder %s18, 0
    %p81 = por %p79, %p80
    %p82 = scmp.ne.s32.totalorder %s70, %s71
    %p83 = scmp.eq.s32.totalorder %s19, 1
    %p84 = por %p82, %p83
    %p86 = scmp.ne.s32.totalorder %s71, %s85
    %p87 = scmp.eq.s32.totalorder %s19, 0
    %p88 = por %p86, %p87
    %s90 = sadd.s32 %s89, 1
    %p93 = scmp.eq.s32.totalorder %s13, 1
    %p94 = scmp.ne.s32.totalorder %s89, %s91
    %p95 = scmp.eq.s32.totalorder %s13, 0
    %p96 = por %p94, %p95
    %p97 = scmp.ne.s32.totalorder %s89, %s91
    %p98 = scmp.eq.s32.totalorder %s18, 1
    %p99 = por %p97, %p98
    %p100 = scmp.ne.s32.totalorder %s91, %s92
    %p101 = scmp.eq.s32.totalorder %s18, 0
    %p102 = por %p100, %p101
    %p103 = scmp.ne.s32.totalorder %s91, %s92
    %p104 = scmp.eq.s32.totalorder %s19, 1
    %p105 = por %p103, %p104
    %p107 = scmp.ne.s32.totalorder %s92, %s106
    %p108 = scmp.eq.s32.totalorder %s19, 0
    %p109 = por %p107, %p108
    %s111 = sadd.s32 %s110, 1
    %p114 = scmp.eq.s32.totalorder %s13, 1
    %p115 = scmp.ne.s32.totalorder %s110, %s112
    %p116 = scmp.eq.s32.totalorder %s13, 0
    %p117 = por %p115, %p116
    %p118 = scmp.ne.s32.totalorder %s110, %s112
    %p119 = scmp.eq.s32.totalorder %s18, 1
    %p120 = por %p118, %p119
    %p121 = scmp.ne.s32.totalorder %s112, %s113
    %p122 = scmp.eq.s32.totalorder %s18, 0
    %p123 = por %p121, %p122
    %p124 = scmp.ne.s32.totalorder %s112, %s113
    %p125 = scmp.eq.s32.totalorder %s19, 1
    %p126 = por %p124, %p125
    %p128 = scmp.ne.s32.totalorder %s113, %s127
    %p129 = scmp.eq.s32.totalorder %s19, 0
    %p130 = por %p128, %p129
    %s132 = sadd.s32 %s131, 1
    %p135 = scmp.eq.s32.totalorder %s13, 1
    %p136 = scmp.ne.s32.totalorder %s131, %s133
    %p137 = scmp.eq.s32.totalorder %s13, 0
    %p138 = por %p136, %p137
    %p139 = scmp.ne.s32.totalorder %s131, %s133
    %p140 = scmp.eq.s32.totalorder %s18, 1
    %p141 = por %p139, %p140
    %p142 = scmp.ne.s32.totalorder %s133, %s134
    %p143 = scmp.eq.s32.totalorder %s18, 0
    %p144 = por %p142, %p143
    %p145 = scmp.ne.s32.totalorder %s133, %s134
    %p146 = scmp.eq.s32.totalorder %s19, 1
    %p147 = por %p145, %p146
    %p149 = scmp.ne.s32.totalorder %s134, %s148
    %p150 = scmp.eq.s32.totalorder %s19, 0
    %p151 = por %p149, %p150
    %s153 = sadd.s32 %s152, 1
    %p156 = scmp.eq.s32.totalorder %s13, 1
    %p157 = scmp.ne.s32.totalorder %s152, %s154
    %p158 = scmp.eq.s32.totalorder %s13, 0
    %p159 = por %p157, %p158
    %p160 = scmp.ne.s32.totalorder %s152, %s154
    %p161 = scmp.eq.s32.totalorder %s18, 1
    %p162 = por %p160, %p161
    %p163 = scmp.ne.s32.totalorder %s154, %s155
    %p164 = scmp.eq.s32.totalorder %s18, 0
    %p165 = por %p163, %p164
    %p166 = scmp.ne.s32.totalorder %s154, %s155
    %p167 = scmp.eq.s32.totalorder %s19, 1
    %p168 = por %p166, %p167
    %p170 = scmp.ne.s32.totalorder %s155, %s169
    %p171 = scmp.eq.s32.totalorder %s19, 0
    %p172 = por %p170, %p171
    %s173 = ssub.s32 %s13, %s20
    %p174 = scmp.eq.s32.totalorder %s173, 0
    %s176 = sadd.s32 %s175, 1
    %s177 = scalar_select %p174, %s175, %s176
    %p180 = pneg %p174
    %p181 = scmp.eq.s32.totalorder %s13, 1
    %p182 = por %p180, %p181
    %p183 = scmp.ne.s32.totalorder %s175, %s178
    %p184 = scmp.eq.s32.totalorder %s13, 0
    %p185 = por %p183, %p184
    %p186 = scmp.ne.s32.totalorder %s175, %s178
    %p187 = scmp.eq.s32.totalorder %s18, 1
    %p188 = por %p186, %p187
    %p189 = scmp.ne.s32.totalorder %s178, %s179
    %p190 = scmp.eq.s32.totalorder %s18, 0
    %p191 = por %p189, %p190
    %p192 = scmp.ne.s32.totalorder %s178, %s179
    %p193 = scmp.eq.s32.totalorder %s19, 1
    %p194 = por %p192, %p193
    %p196 = scmp.ne.s32.totalorder %s179, %s195
    %p197 = scmp.eq.s32.totalorder %s19, 0
    %p198 = por %p196, %p197
    %p199 = scmp.le.s32.totalorder 1, %s13
    %p200 = scmp.lt.s32.totalorder %s13, 3
    %p201 = pnand %p199, %p200
    %p202 = pneg %p201
    // Predicated region
    $region9: #{tpu_custom_call.1} parent=5 // pred_check
      _
    $region10: #{tpu_custom_call.1} parent=5 // pred_check_branch
      %204 = sbr.rel (%p201) target = $region12
    $region11: #{tpu_custom_call.1} parent=5 // pred_region
      %s205 = ssub.s32 %s13, 1
      // Predicated region
      $region13: #{tpu_custom_call.1} parent=11 // pred_check
        %p206 = pneg %p60
      $region14: #{tpu_custom_call.1} parent=11 // pred_check_branch
        %208 = sbr.rel (%p206) target = $region16
      $region15: #{tpu_custom_call.1} parent=11 // pred_region
        _
      $region16: #{tpu_custom_call.1} parent=11 // pred_fallthru
        _
      // Predicated region
      $region17: #{tpu_custom_call.1} parent=11 // pred_check
        %p209 = pneg %p81
      $region18: #{tpu_custom_call.1} parent=11 // pred_check_branch
        %211 = sbr.rel (%p209) target = $region20
      $region19: #{tpu_custom_call.1} parent=11 // pred_region
        _
      $region20: #{tpu_custom_call.1} parent=11 // pred_fallthru
        _
      // Predicated region
      $region21: #{tpu_custom_call.1} parent=11 // pred_check
        %p212 = pneg %p102
      $region22: #{tpu_custom_call.1} parent=11 // pred_check_branch
        %214 = sbr.rel (%p212) target = $region24
      $region23: #{tpu_custom_call.1} parent=11 // pred_region
        _
      $region24: #{tpu_custom_call.1} parent=11 // pred_fallthru
        _
      // Predicated region
      $region25: #{tpu_custom_call.1} parent=11 // pred_check
        %p215 = pneg %p123
      $region26: #{tpu_custom_call.1} parent=11 // pred_check_branch
        %217 = sbr.rel (%p215) target = $region28
      $region27: #{tpu_custom_call.1} parent=11 // pred_region
        _
      $region28: #{tpu_custom_call.1} parent=11 // pred_fallthru
        _
      // Predicated region
      $region29: #{tpu_custom_call.1} parent=11 // pred_check
        %p218 = pneg %p144
      $region30: #{tpu_custom_call.1} parent=11 // pred_check_branch
        %220 = sbr.rel (%p218) target = $region32
      $region31: #{tpu_custom_call.1} parent=11 // pred_region
        _
      $region32: #{tpu_custom_call.1} parent=11 // pred_fallthru
        _
      // Predicated region
      $region33: #{tpu_custom_call.1} parent=11 // pred_check
        %p221 = pneg %p165
      $region34: #{tpu_custom_call.1} parent=11 // pred_check_branch
        %223 = sbr.rel (%p221) target = $region36
      $region35: #{tpu_custom_call.1} parent=11 // pred_region
        _
      $region36: #{tpu_custom_call.1} parent=11 // pred_fallthru
        _
    $region12: #{tpu_custom_call.1} parent=5 // pred_fallthru
      _
    %p224 = scmp.lt.s32.totalorder %s13, 2
    // Predicated region
    $region37: #{tpu_custom_call.1} parent=5 // pred_check
      %p225 = pneg %p224
    $region38: #{tpu_custom_call.1} parent=5 // pred_check_branch
      %227 = sbr.rel (%p225) target = $region40
    $region39: #{tpu_custom_call.1} parent=5 // pred_region
      // Predicated region
      $region41: #{tpu_custom_call.1} parent=39 // pred_check
        %p228 = pneg %p33
      $region42: #{tpu_custom_call.1} parent=39 // pred_check_branch
        %230 = sbr.rel (%p228) target = $region44
      $region43: #{tpu_custom_call.1} parent=39 // pred_region
        %p231 = scmp.lt.s32.totalorder %s13, 1
        %s232 = scalar_select %p231, %s13, 1
        %s233 = smul.addr %s232, 8
        %s234 = scalar_lea.vmem %s0, %s233
      $region44: #{tpu_custom_call.1} parent=39 // pred_fallthru
        _
    $region40: #{tpu_custom_call.1} parent=5 // pred_fallthru
      _
    %p235 = scmp.le.s32.totalorder 1, %s13
    %p236 = scmp.lt.s32.totalorder %s13, 3
    %p237 = pnand %p235, %p236
    %p238 = pneg %p237
    // Predicated region
    $region45: #{tpu_custom_call.1} parent=5 // pred_check
      _
    $region46: #{tpu_custom_call.1} parent=5 // pred_check_branch
      %240 = sbr.rel (%p237) target = $region48
    $region47: #{tpu_custom_call.1} parent=5 // pred_region
      %s241 = ssub.s32 %s13, 1
      %p242 = scmp.lt.s32.totalorder %s18, 1
      %s243 = scalar_select %p242, %s18, 1
      %s244 = smul.addr %s243, 8
      %s245 = scalar_lea.vmem %s0, %s244
      %p246 = pneg %p39
      %p247 = pneg %p36
      %p248 = pneg %p60
      %p249 = pneg %p57
      %p250 = pneg %p81
      %p251 = pneg %p78
      %p252 = pneg %p102
      %p253 = pneg %p99
      %p254 = pneg %p123
      %p255 = pneg %p120
      %p256 = pneg %p144
      %p257 = pneg %p141
      %p258 = pneg %p165
      %p259 = pneg %p162
      %p260 = pneg %p191
      %p261 = pneg %p188
      %p262 = scmp.lt.s32.totalorder %s18, 1
      %s263 = scalar_select %p262, %s18, 1
      %s264 = smul.addr %s263, 8
      %s265 = scalar_lea.vmem %s7, %s264
      %p266 = scmp.lt.s32.totalorder %s18, 1
      %s267 = scalar_select %p266, %s18, 1
      %s268 = smul.addr %s267, 8
      %s269 = scalar_lea.vmem %s0, %s268
      %p270 = scmp.lt.s32.totalorder %s18, 1
      %s271 = scalar_select %p270, %s18, 1
      %s272 = smul.addr %s271, 8
      %s273 = scalar_lea.vmem %s7, %s272
      %v274 = vld [vmem:[%s269] sm:$0xff]
      %v275 = vld [vmem:[%s1] sm:$0xff]
      %v276 = vld [vmem:[%s1 + $0x8] sm:$0xff]
      %v277 = vld [vmem:[%s1 + $0x10] sm:$0xff]
      %v278 = vld [vmem:[%s1 + $0x18] sm:$0xff]
      %vm279 = vcmask 261120
      %v281 = vsel %vm279, %v274, 0
      %283 = vmatpush.msra.mxu0 0.0
      %284 = vmatpush.msra.mxu0 0.0
      %285 = vmatpush.msra.mxu0 0.0
      %286 = vmatpush.msra.mxu0 0.0
      %287 = vmatpush.msra.mxu0 0.0
      %288 = vmatpush.msra.mxu0 0.0
      %289 = vmatpush.msra.mxu0 0.0
      %290 = vmatpush.msra.mxu0 0.0
      %291 = vmatpush.msra.mxu0 0.0
      %292 = vmatpush.msra.mxu0 0.0
      %293 = vmatpush.msra.mxu0 0.0
      %294 = vmatpush.msra.mxu0 0.0
      %295 = vmatpush.msra.mxu0 %v278
      %296 = vmatpush.msra.mxu0 %v277
      %297 = vmatpush.msra.mxu0 %v276
      %298 = vmatpush.msra.mxu0 %v275
      %299 = vmatmul.f32.gmra.mxu0 %v281
      %v300 = vpop.f32.mrf.mxu0
      %v301 = vadd.f32 0.0, %v300
      %302 = vdwg.mxu0
      %v303 = vmul.f32 %v274, %v274
      %v304 = vsel %vm279, %v303, 0.0
      %305 = vadd.xlane.f32.xlu0 %v304
      %v306 = vpop.xlane.xlu0 %305
      %v307 = vadd.f32 %v306, %v301
      %v308 = vld [vmem:[%s2] sm:$0x1]
      %v310 = vperm.slane %v308, 0
      %v312 = vadd.f32 %v307, %v310
      %v313 = vmax.f32 %v312, 0.0
      %v314 = vld [vmem:[%s3] sm:$0xff]
      %v315 = vld [vmem:[%s3 + $0x8] sm:$0xff]
      %v316 = vld [vmem:[%s3 + $0x10] sm:$0xff]
      %v317 = vld [vmem:[%s3 + $0x18] sm:$0xff]
      %v318 = vld [vmem:[%s4] sm:$0x1]
      %v320 = vperm.slane %v318, 0
      %322 = vmatpush.msra.mxu0 0.0
      %323 = vmatpush.msra.mxu0 0.0
      %324 = vmatpush.msra.mxu0 0.0
      %325 = vmatpush.msra.mxu0 0.0
      %326 = vmatpush.msra.mxu0 0.0
      %327 = vmatpush.msra.mxu0 0.0
      %328 = vmatpush.msra.mxu0 0.0
      %329 = vmatpush.msra.mxu0 0.0
      %330 = vmatpush.msra.mxu0 0.0
      %331 = vmatpush.msra.mxu0 0.0
      %332 = vmatpush.msra.mxu0 0.0
      %333 = vmatpush.msra.mxu0 0.0
      %334 = vmatpush.msra.mxu0 %v317
      %335 = vmatpush.msra.mxu0 %v316
      %336 = vmatpush.msra.mxu0 %v315
      %337 = vmatpush.msra.mxu0 %v314
      %338 = vmatmul.f32.gmra.mxu0 %v281
      %v339 = vpop.f32.mrf.mxu0
      %v340 = vadd.f32 %v320, %v339
      %341 = vdwg.mxu0
      %vm342 = vcmask 130048
      %v343 = vsel %vm342, %v340, -inf
      %344 = vmax.xlane.f32.xlu0 %v343
      %v345 = vpop.xlane.xlu0 %344
      %v346 = vsub.f32 %v340, %v345
      %v347 = vmul.f32 %v346, 1.442695
      %v348 = vpow.pop %v347
      %v349 = vsel %vm342, %v348, 0.0
      %350 = vadd.xlane.f32.xlu0 %v349
      %v351 = vpop.xlane.xlu0 %350
      %v352 = vrcp.pop %v351
      %v353 = vsub.f32 %v346, %v313
      %v354 = vmul.f32 %v353, 1.442695
      %v355 = vpow.pop %v354
      %v356 = vmul.f32 %v355, %v352
      %v357 = vld [vmem:[%s5] sm:$0xff]
      %v358 = vld [vmem:[%s5 + $0x8] sm:$0xff]
      %v359 = vld [vmem:[%s6] sm:$0x1]
      %v361 = vperm.slane %v359, 0
      %v364 = vsel %vm342, %v356, 0
      %366 = vmatpush.msra.mxu0 0.0
      %367 = vmatpush.msra.mxu0 0.0
      %368 = vmatpush.msra.mxu0 0.0
      %369 = vmatpush.msra.mxu0 0.0
      %370 = vmatpush.msra.mxu0 0.0
      %371 = vmatpush.msra.mxu0 0.0
      %372 = vmatpush.msra.mxu0 0.0
      %373 = vmatpush.msra.mxu0 0.0
      %374 = vmatpush.msra.mxu0 0.0
      %375 = vmatpush.msra.mxu0 0.0
      %376 = vmatpush.msra.mxu0 0.0
      %377 = vmatpush.msra.mxu0 0.0
      %378 = vmatpush.msra.mxu0 0.0
      %379 = vmatpush.msra.mxu0 0.0
      %380 = vmatpush.msra.mxu0 %v358
      %381 = vmatpush.msra.mxu0 %v357
      %382 = vmatmul.f32.gmra.mxu0 %v364
      %v383 = vpop.f32.mrf.mxu0
      %v384 = vadd.f32 %v361, %v383
      %385 = vdwg.mxu0
      %vm386 = vcmask 64512
      %387 = vst.msk [vmem:[%s273] sm:$0xff] %vm386, %v384
      %p388 = scmp.lt.s32.totalorder %s18, 1
      %s389 = scalar_select %p388, %s18, 1
      %s390 = smul.addr %s389, 8
      %s391 = scalar_lea.vmem %s7, %s390
      // Predicated region
      $region49: #{tpu_custom_call.1} parent=47 // pred_check
        %p392 = pneg %p188
      $region50: #{tpu_custom_call.1} parent=47 // pred_check_branch
        %394 = sbr.rel (%p392) target = $region52
      $region51: #{tpu_custom_call.1} parent=47 // pred_region
        _
      $region52: #{tpu_custom_call.1} parent=47 // pred_fallthru
        _
    $region48: #{tpu_custom_call.1} parent=5 // pred_fallthru
      _
    %p395 = scmp.le.s32.totalorder 2, %s13
    // Predicated region
    $region53: #{tpu_custom_call.1} parent=5 // pred_check
      %p396 = pneg %p395
    $region54: #{tpu_custom_call.1} parent=5 // pred_check_branch
      %398 = sbr.rel (%p396) target = $region56
    $region55: #{tpu_custom_call.1} parent=5 // pred_region
      %s399 = ssub.s32 %s13, 2
      // Predicated region
      $region57: #{tpu_custom_call.1} parent=55 // pred_check
        %p400 = pneg %p194
      $region58: #{tpu_custom_call.1} parent=55 // pred_check_branch
        %402 = sbr.rel (%p400) target = $region60
      $region59: #{tpu_custom_call.1} parent=55 // pred_region
        %p403 = scmp.lt.s32.totalorder %s19, 1
        %s404 = scalar_select %p403, %s19, 1
        %s405 = smul.addr %s404, 8
        %s406 = scalar_lea.vmem %s7, %s405
      $region60: #{tpu_custom_call.1} parent=55 // pred_fallthru
        _
    $region56: #{tpu_custom_call.1} parent=5 // pred_fallthru
      _
  $region6: #{tpu_custom_call.1} parent=0 // loop_footer
    %s17 = sadd.s32 1, %s13
  $region7: #{tpu_custom_call.1} parent=0 // loop_footer_branch
    %12 = sbr.rel target = $region3
  $region8: #{tpu_custom_call.1} parent=0 // loop_exit
    _

</llo_original>
